<compile_context>
chip_gen: v5e
topology: v5e:2x2
jax: 0.10.0
libtpu: 0.0.40
codegen_flags: <defaults>
</compile_context>

<pallas_src>
import functools

import jax
import jax.numpy as jnp
from jax import lax
from jax.experimental import pallas as pl
from jax.experimental.pallas import tpu as pltpu


def _round_up(x, m):
    return ((x + m - 1) // m) * m


# ------------------------------ Pallas kernel ------------------------------

def fused_tokenizer_kernel(p_ref, w_ref, pe_ref, g_ref, b_ref, o_ref,
                           *, e_true, e_pad):
    # p_ref : (TILE_SEQ, K)      bf16  patch rows for one (seq-tile, batch)
    # w_ref : (K, E_pad)         bf16  flattened conv weight (E lane-padded)
    # pe_ref: (TILE_SEQ, E_pad)  bf16  row 0 = cls, rows 1.. = pos_emb + conv_b
    # g_ref : (1, E_pad)         f32   LayerNorm gamma (padded cols zeroed)
    # b_ref : (1, E_pad)         f32   LayerNorm beta  (padded cols zeroed)
    # o_ref : (TILE_SEQ, E_pad)  out_dtype
    x = jnp.dot(p_ref[...], w_ref[...], preferred_element_type=jnp.float32)
    x = x + pe_ref[...].astype(jnp.float32)

    # LayerNorm over the true embed width. Padded columns of x are exactly 0
    # (zero-padded weight and pe), so the row sum needs no mask; the centered
    # sum-of-squares gets an exact scalar correction for the padded columns.
    inv_e = 1.0 / float(e_true)
    n_pad = float(e_pad - e_true)
    mean = jnp.sum(x, axis=-1, keepdims=True) * inv_e
    d = x - mean
    var = (jnp.sum(d * d, axis=-1, keepdims=True) - n_pad * mean * mean) * inv_e
    var = jnp.maximum(var, 0.0)
    inv = lax.rsqrt(var + 1e-5)  # PyTorch nn.LayerNorm default eps
    o_ref[...] = (d * inv * g_ref[...] + b_ref[...]).astype(o_ref.dtype)


def _fused_call(patches, w_mat, pe_tab, gamma, beta, *, tile_seq, e_true,
                out_dtype):
    bs, seq_pad, k = patches.shape
    e_pad = w_mat.shape[1]
    # Batch is the innermost (fastest) grid axis: pe / w / gamma / beta block
    # indices are constant across consecutive steps -> no re-DMA per batch.
    grid = (seq_pad // tile_seq, bs)
    kernel = functools.partial(fused_tokenizer_kernel, e_true=e_true,
                               e_pad=e_pad)
    return pl.pallas_call(
        kernel,
        out_shape=jax.ShapeDtypeStruct((bs, seq_pad, e_pad), out_dtype),
        grid_spec=pltpu.PrefetchScalarGridSpec(
            num_scalar_prefetch=0,
            grid=grid,
            in_specs=[
                # patch rows: tiled over (batch, seq); full-K block (no K pad)
                pl.BlockSpec((None, tile_seq, k), lambda s, b: (b, s, 0)),
                # weight: fully resident, constant block across the grid
                pl.BlockSpec((k, e_pad), lambda s, b: (0, 0)),
                # pe/cls/bias table: constant across the inner batch axis
                pl.BlockSpec((tile_seq, e_pad), lambda s, b: (s, 0)),
                pl.BlockSpec((1, e_pad), lambda s, b: (0, 0)),
                pl.BlockSpec((1, e_pad), lambda s, b: (0, 0)),
            ],
            out_specs=pl.BlockSpec((None, tile_seq, e_pad),
                                   lambda s, b: (b, s, 0)),
        ),
        compiler_params=pltpu.CompilerParams(
            dimension_semantics=("parallel", "parallel")),
    )(patches, w_mat, pe_tab, gamma, beta)


# ------------------------------ Module wrapper -----------------------------

class ImageTokenizer2Pallas:
    def __init__(self, embed, patch_size, in_channels=3, max_len=10000,
                 key=None, out_dtype=jnp.float32):
        if key is None:
            key = jax.random.PRNGKey(0)
        k_w, k_b, k_cls = jax.random.split(key, 3)

        self.embed = embed
        self.patch_size = patch_size
        self.in_channels = in_channels
        self.out_dtype = out_dtype  # bf16 halves writeback when consumer allows

        fan_in = in_channels * patch_size * patch_size
        bound = 1.0 / float(jnp.sqrt(fan_in))
        # Conv2d(in_channels, embed, patch_size, stride=patch_size) params
        self.conv_w = jax.random.uniform(
            k_w, (embed, in_channels, patch_size, patch_size),
            minval=-bound, maxval=bound, dtype=jnp.float32)
        self.conv_b = jax.random.uniform(
            k_b, (embed,), minval=-bound, maxval=bound, dtype=jnp.float32)

        # nn.Parameter(torch.zeros(max_len, 1, embed))
        self.pos_emb = jnp.zeros((max_len, 1, embed), dtype=jnp.float32)
        # nn.Parameter(torch.randn(1, 1, embed))
        self.cls = jax.random.normal(k_cls, (1, 1, embed), dtype=jnp.float32)
        # nn.LayerNorm(embed) defaults
        self.ln_gamma = jnp.ones((embed,), dtype=jnp.float32)
        self.ln_beta = jnp.zeros((embed,), dtype=jnp.float32)

    def __call__(self, x):
        # x: (bs, C, H, W) -- NCHW, same as PyTorch
        bs, c, H, W = x.shape
        p, e = self.patch_size, self.embed
        h, w = H // p, W // p
        hw = h * w
        k = c * p * p
        seq_len = hw + 1                      # +1 for the cls token row

        # Lane-dense embed width; LayerNorm denominators use the true e.
        e_pad = _round_up(e, 128)
        # 16-row granule (bf16 sublane pairs), capped at 256 (MXU M dim,
        # bounds seq-padding waste, keeps >=2 parallel programs for v7x).
        tile_seq = min(256, _round_up(seq_len, 16))
        seq_pad = _round_up(seq_len, tile_seq)

        # --- glue: bf16 cast BEFORE the 6-D transpose (halves relayout bytes)
        # (bs,C,h,p,w,p) -> (bs,h,w,C,p,p) -> (bs, h*w, C*p*p); column order
        # (C, p, p) matches the flattened conv weight. One bf16 pad supplies
        # the zero cls patch row (row 0) and the seq tail padding.
        patches = x.astype(jnp.bfloat16).reshape(bs, c, h, p, w, p)
        patches = patches.transpose(0, 2, 4, 1, 3, 5).reshape(bs, hw, k)
        patches = jnp.pad(patches, ((0, 0), (1, seq_pad - seq_len), (0, 0)))

        # conv weight as matmul operand: (E, C*p*p) -> (K, E_pad), bf16.
        w_mat = self.conv_w.reshape(e, k).T.astype(jnp.bfloat16)
        if e_pad != e:
            w_mat = jnp.pad(w_mat, ((0, 0), (0, e_pad - e)))

        # pe table (bf16) with conv bias folded in; row 0 carries the cls
        # token (no positional embedding / conv bias for cls, as in PyTorch).
        pe_tab = jnp.zeros((seq_pad, e_pad), dtype=jnp.float32)
        pe_tab = pe_tab.at[0, :e].set(self.cls.reshape(e))
        pe_tab = pe_tab.at[1:seq_len, :e].set(
            self.pos_emb[:hw, 0, :] + self.conv_b[None, :])
        pe_tab = pe_tab.astype(jnp.bfloat16)

        gamma = jnp.zeros((1, e_pad), jnp.float32).at[0, :e].set(self.ln_gamma)
        beta = jnp.zeros((1, e_pad), jnp.float32).at[0, :e].set(self.ln_beta)

        out = _fused_call(patches, w_mat, pe_tab, gamma, beta,
                          tile_seq=tile_seq, e_true=e,
                          out_dtype=self.out_dtype)
        # Drop seq / embed padding; output is (bs, hw+1, E) -- PyTorch layout.
        return out[:, :seq_len, :e]


# --------------------------- pure-JAX reference ----------------------------

def _reference(model, x):
    bs, c, H, W = x.shape
    p, e = model.patch_size, model.embed
    h, w = H // p, W // p
    patches = x.reshape(bs, c, h, p, w, p).transpose(2, 4, 0, 1, 3, 5)
    patches = patches.reshape(h * w, bs, c * p * p)
    tok = patches @ model.conv_w.reshape(e, -1).T + model.conv_b   # (hw, bs, e)
    tok = tok + model.pos_emb[:h * w]
    cls = jnp.broadcast_to(model.cls, (1, bs, e))
    seq = jnp.concatenate([cls, tok], axis=0).transpose(1, 0, 2)   # (bs, hw+1, e)
    mean = seq.mean(-1, keepdims=True)
    var = ((seq - mean) ** 2).mean(-1, keepdims=True)
    return (seq - mean) * lax.rsqrt(var + 1e-5) * model.ln_gamma + model.ln_beta


if __name__ == "__main__":
    key = jax.random.PRNGKey(0)
    k_x, k_params = jax.random.split(key)

    bs, in_channels, H, W = 2, 3, 16, 16
    embed, patch_size = 32, 4

    x = jax.random.normal(k_x, (bs, in_channels, H, W), dtype=jnp.float32)

    model = ImageTokenizer2Pallas(embed, patch_size, in_channels=in_channels,
                                  key=k_params)
    fwd = jax.jit(model.__call__)
    out = jax.block_until_ready(fwd(x))

    expected_seq = (H // patch_size) * (W // patch_size) + 1
    assert out.shape == (bs, expected_seq, embed), out.shape
    assert bool(jnp.all(jnp.isfinite(out)))

    # Correctness vs fp32 reference (bf16 MXU operands -> loose tolerance).
    ref = _reference(model, x)
    max_err = float(jnp.max(jnp.abs(out.astype(jnp.float32) - ref)))
    assert max_err < 0.1, f"max abs err {max_err}"

    print("KERNEL_OK")
</pallas_src>

<mosaic_0001>
module attributes {stable_mosaic.version = 11 : i64} {
  func.func @fused_tokenizer_kernel(%arg0: i32, %arg1: i32, %arg2: memref<1x32x48xbf16, #tpu.memory_space<vmem>>, %arg3: memref<48x128xbf16, #tpu.memory_space<vmem>>, %arg4: memref<32x128xbf16, #tpu.memory_space<vmem>>, %arg5: memref<1x128xf32, #tpu.memory_space<vmem>>, %arg6: memref<1x128xf32, #tpu.memory_space<vmem>>, %arg7: memref<1x32x128xf32, #tpu.memory_space<vmem>>) attributes {dimension_semantics = [#tpu.dimension_semantics<parallel>, #tpu.dimension_semantics<parallel>], iteration_bounds = array<i64: 1, 2>, scalar_prefetch = 0 : i64, scratch_operands = 0 : i64, tpu.core_type = #tpu.core_type<tc>, window_params = [{transform_indices = @transform_0, window_bounds = array<i64: 1, 32, 48>}, {pipeline_mode = #tpu.pipeline_mode<synchronous>, transform_indices = @transform_1, window_bounds = array<i64: 48, 128>}, {transform_indices = @transform_2, window_bounds = array<i64: 32, 128>}, {pipeline_mode = #tpu.pipeline_mode<synchronous>, transform_indices = @transform_3, window_bounds = array<i64: 1, 128>}, {pipeline_mode = #tpu.pipeline_mode<synchronous>, transform_indices = @transform_4, window_bounds = array<i64: 1, 128>}, {transform_indices = @transform_5, window_bounds = array<i64: 1, 32, 128>}]} {
    %c0 = arith.constant 0 : index
    %c0_0 = arith.constant 0 : index
    %c0_1 = arith.constant 0 : index
    %0 = vector.load %arg2[%c0, %c0_0, %c0_1] : memref<1x32x48xbf16, #tpu.memory_space<vmem>>, vector<1x32x48xbf16>
    %1 = vector.shape_cast %0 : vector<1x32x48xbf16> to vector<32x48xbf16>
    %c0_2 = arith.constant 0 : index
    %c0_3 = arith.constant 0 : index
    %2 = vector.load %arg3[%c0_2, %c0_3] : memref<48x128xbf16, #tpu.memory_space<vmem>>, vector<48x128xbf16>
    %cst = arith.constant dense<0.000000e+00> : vector<32x128xf32>
    %3 = tpu.matmul %1, %2, %cst {dimension_numbers = #tpu.dot_dimension_numbers<[1], [0], [0], [1], [0, 0, 1, 1], [], []>} : vector<32x48xbf16>, vector<48x128xbf16>, vector<32x128xf32> -> vector<32x128xf32>
    %c0_4 = arith.constant 0 : index
    %c0_5 = arith.constant 0 : index
    %4 = vector.load %arg4[%c0_4, %c0_5] : memref<32x128xbf16, #tpu.memory_space<vmem>>, vector<32x128xbf16>
    %5 = arith.extf %4 : vector<32x128xbf16> to vector<32x128xf32>
    %6 = arith.addf %3, %5 : vector<32x128xf32>
    %cst_6 = arith.constant dense<0.000000e+00> : vector<32xf32>
    %7 = vector.multi_reduction <add>, %6, %cst_6 [1] : vector<32x128xf32> to vector<32xf32>
    %8 = vector.shape_cast %7 : vector<32xf32> to vector<32x1xf32>
    %cst_7 = arith.constant 3.125000e-02 : f32
    %9 = vector.broadcast %cst_7 : f32 to vector<32x1xf32>
    %10 = arith.mulf %8, %9 : vector<32x1xf32>
    %11 = vector.broadcast %10 : vector<32x1xf32> to vector<32x128xf32>
    %12 = arith.subf %6, %11 : vector<32x128xf32>
    %13 = arith.mulf %12, %12 : vector<32x128xf32>
    %cst_8 = arith.constant dense<0.000000e+00> : vector<32xf32>
    %14 = vector.multi_reduction <add>, %13, %cst_8 [1] : vector<32x128xf32> to vector<32xf32>
    %15 = vector.shape_cast %14 : vector<32xf32> to vector<32x1xf32>
    %cst_9 = arith.constant 9.600000e+01 : f32
    %16 = vector.broadcast %cst_9 : f32 to vector<32x1xf32>
    %17 = arith.mulf %16, %10 : vector<32x1xf32>
    %18 = arith.mulf %17, %10 : vector<32x1xf32>
    %19 = arith.subf %15, %18 : vector<32x1xf32>
    %cst_10 = arith.constant 3.125000e-02 : f32
    %20 = vector.broadcast %cst_10 : f32 to vector<32x1xf32>
    %21 = arith.mulf %19, %20 : vector<32x1xf32>
    %cst_11 = arith.constant 0.000000e+00 : f32
    %22 = vector.broadcast %cst_11 : f32 to vector<32x1xf32>
    %23 = arith.maximumf %21, %22 : vector<32x1xf32>
    %cst_12 = arith.constant 9.99999974E-6 : f32
    %24 = vector.broadcast %cst_12 : f32 to vector<32x1xf32>
    %25 = arith.addf %23, %24 : vector<32x1xf32>
    %26 = math.rsqrt %25 : vector<32x1xf32>
    %27 = vector.broadcast %26 : vector<32x1xf32> to vector<32x128xf32>
    %28 = arith.mulf %12, %27 : vector<32x128xf32>
    %c0_13 = arith.constant 0 : index
    %c0_14 = arith.constant 0 : index
    %29 = vector.load %arg5[%c0_13, %c0_14] : memref<1x128xf32, #tpu.memory_space<vmem>>, vector<1x128xf32>
    %30 = vector.broadcast %29 : vector<1x128xf32> to vector<32x128xf32>
    %31 = arith.mulf %28, %30 : vector<32x128xf32>
    %c0_15 = arith.constant 0 : index
    %c0_16 = arith.constant 0 : index
    %32 = vector.load %arg6[%c0_15, %c0_16] : memref<1x128xf32, #tpu.memory_space<vmem>>, vector<1x128xf32>
    %33 = vector.broadcast %32 : vector<1x128xf32> to vector<32x128xf32>
    %34 = arith.addf %31, %33 : vector<32x128xf32>
    %c0_17 = arith.constant 0 : index
    %c0_18 = arith.constant 0 : index
    %c0_19 = arith.constant 0 : index
    %35 = vector.load %arg7[%c0_17, %c0_18, %c0_19] : memref<1x32x128xf32, #tpu.memory_space<vmem>>, vector<1x32x128xf32>
    %36 = vector.shape_cast %35 : vector<1x32x128xf32> to vector<32x128xf32>
    %37 = vector.shape_cast %34 : vector<32x128xf32> to vector<1x32x128xf32>
    tpu.vector_store %arg7[%c0_17, %c0_18, %c0_19], %37 {strides = array<i32>} : memref<1x32x128xf32, #tpu.memory_space<vmem>>, vector<1x32x128xf32>,
    return
  }
  func.func @transform_0(%arg0: i32, %arg1: i32) -> (i32, i32, i32) {
    %c0_i32 = arith.constant 0 : i32
    %c0_i32_0 = arith.constant 0 : i32
    return %arg1, %arg0, %c0_i32 : i32, i32, i32
  }
  func.func @transform_1(%arg0: i32, %arg1: i32) -> (i32, i32) {
    %c0_i32 = arith.constant 0 : i32
    %c0_i32_0 = arith.constant 0 : i32
    %c0_i32_1 = arith.constant 0 : i32
    return %c0_i32, %c0_i32_0 : i32, i32
  }
  func.func @transform_2(%arg0: i32, %arg1: i32) -> (i32, i32) {
    %c0_i32 = arith.constant 0 : i32
    %c0_i32_0 = arith.constant 0 : i32
    return %arg0, %c0_i32 : i32, i32
  }
  func.func @transform_3(%arg0: i32, %arg1: i32) -> (i32, i32) {
    %c0_i32 = arith.constant 0 : i32
    %c0_i32_0 = arith.constant 0 : i32
    %c0_i32_1 = arith.constant 0 : i32
    return %c0_i32, %c0_i32_0 : i32, i32
  }
  func.func @transform_4(%arg0: i32, %arg1: i32) -> (i32, i32) {
    %c0_i32 = arith.constant 0 : i32
    %c0_i32_0 = arith.constant 0 : i32
    %c0_i32_1 = arith.constant 0 : i32
    return %c0_i32, %c0_i32_0 : i32, i32
  }
  func.func @transform_5(%arg0: i32, %arg1: i32) -> (i32, i32, i32) {
    %c0_i32 = arith.constant 0 : i32
    %c0_i32_0 = arith.constant 0 : i32
    return %arg1, %arg0, %c0_i32 : i32, i32, i32
  }
}

</mosaic_0001>

<llo_original>
// kernel: a_call__.1
$region0: #{a_call__.1}
  #allocation0 [shape = 'u32[]', space=smem, size = 0x4, offset = 0x4, fixed_abs, tag = 'smem constant byte address 0x4 - core index']
  #allocation1 [shape = 'u32[72,128]{1,0:T(1,128)}', space=vmem, size = 0x9000, scoped, tag = 'internal scratch']
  %s0 = inlined_call_operand.vmem [shape: bf16[2,32,48], index: 0, kind: input, shape index: {}]
  %s1 = inlined_call_operand.vmem [shape: bf16[48,128], index: 1, kind: input, shape index: {}]
  %s2 = inlined_call_operand.vmem [shape: bf16[32,128], index: 2, kind: input, shape index: {}]
  %s3 = inlined_call_operand.vmem [shape: f32[1,128], index: 3, kind: input, shape index: {}]
  %s4 = inlined_call_operand.vmem [shape: f32[1,128], index: 4, kind: input, shape index: {}]
  %s5 = inlined_call_operand.vmem [shape: f32[2,32,128], index: 5, kind: output, shape index: {}]
  %s6 = sld [smem:[#allocation0]]
  $region53: #{a_call__.1} parent=0
    _
  %s8 = ssub.s32 1, %s6
  %s9 = scalar_select 0, %s8, %s6
  loop: start=0, step=1, limit=4
  $region2: #{a_call__.1} parent=0 // loop_pre_header
    _
  $region3: #{a_call__.1} parent=0 // loop_header
    %s11 = sphi 0, %s15
    %p12 = scmp.ge.s32.totalorder %s11, 4
    %s18 = sphi 0, %s30
    %s19 = sphi 0, %s26
    %s20 = sphi 0, %s18
    %s21 = sphi 0, %s19
    %s22 = sphi 0, %s20
    %s23 = sphi 0, %s21
    %s35 = sphi 0, %s37
    %s38 = sphi 0, %s35
    %s39 = sphi 0, %s38
    %s55 = sphi 0, %s39
    %s59 = sphi 0, %s59
    %s61 = sphi 0, %s59
    %s62 = sphi 0, %s61
    %s76 = sphi 0, %s62
    %s82 = sphi 0, %s84
    %s85 = sphi 0, %s82
    %s86 = sphi 0, %s85
    %s102 = sphi 0, %s86
    %s106 = sphi 0, %s106
    %s108 = sphi 0, %s106
    %s109 = sphi 0, %s108
    %s123 = sphi 0, %s109
    %s127 = sphi 0, %s127
    %s129 = sphi 0, %s127
    %s130 = sphi 0, %s129
    %s144 = sphi 0, %s130
    %s152 = sphi 0, %s154
    %s155 = sphi 0, %s152
    %s156 = sphi 0, %s155
    %s172 = sphi 0, %s156
  $region4: #{a_call__.1} parent=0 // loop_header_branch
    %14 = sbr.rel (%p12) target = $region8
  $region5: #{a_call__.1} parent=0 // loop_body
    %s16 = ssub.s32 %s11, 1
    %s17 = ssub.s32 %s11, 2
    %s24 = sadd.s32 1, %s19
    %p25 = scmp.ge.s32.totalorder %s24, 2
    %s26 = scalar_select %p25, 0, %s24
    %s27 = sadd.s32 1, %s18
    %s28 = scalar_select %p25, %s27, %s18
    %p29 = scmp.ge.s32.totalorder %s28, 1
    %s30 = scalar_select %p29, 0, %s28
    %s31 = ssub.s32 %s19, %s26
    %s32 = ssub.s32 %s18, %s30
    %s33 = sor.u32 %s31, %s32
    %p34 = scmp.eq.s32.totalorder %s33, 0
    %s36 = sadd.s32 %s35, 1
    %s37 = scalar_select %p34, %s35, %s36
    %p40 = pneg %p34
    %p41 = scmp.eq.s32.totalorder %s11, 1
    %p42 = por %p40, %p41
    %p43 = scmp.ne.s32.totalorder %s35, %s38
    %p44 = scmp.eq.s32.totalorder %s11, 0
    %p45 = por %p43, %p44
    %p46 = scmp.ne.s32.totalorder %s35, %s38
    %p47 = scmp.eq.s32.totalorder %s16, 1
    %p48 = por %p46, %p47
    %p49 = scmp.ne.s32.totalorder %s38, %s39
    %p50 = scmp.eq.s32.totalorder %s16, 0
    %p51 = por %p49, %p50
    %p52 = scmp.ne.s32.totalorder %s38, %s39
    %p53 = scmp.eq.s32.totalorder %s17, 1
    %p54 = por %p52, %p53
    %p56 = scmp.ne.s32.totalorder %s39, %s55
    %p57 = scmp.eq.s32.totalorder %s17, 0
    %p58 = por %p56, %p57
    %s60 = sadd.s32 %s59, 1
    %p63 = scmp.eq.s32.totalorder %s11, 1
    %p64 = scmp.ne.s32.totalorder %s59, %s61
    %p65 = scmp.eq.s32.totalorder %s11, 0
    %p66 = por %p64, %p65
    %p67 = scmp.ne.s32.totalorder %s59, %s61
    %p68 = scmp.eq.s32.totalorder %s16, 1
    %p69 = por %p67, %p68
    %p70 = scmp.ne.s32.totalorder %s61, %s62
    %p71 = scmp.eq.s32.totalorder %s16, 0
    %p72 = por %p70, %p71
    %p73 = scmp.ne.s32.totalorder %s61, %s62
    %p74 = scmp.eq.s32.totalorder %s17, 1
    %p75 = por %p73, %p74
    %p77 = scmp.ne.s32.totalorder %s62, %s76
    %p78 = scmp.eq.s32.totalorder %s17, 0
    %p79 = por %p77, %p78
    %s80 = ssub.s32 %s18, %s30
    %p81 = scmp.eq.s32.totalorder %s80, 0
    %s83 = sadd.s32 %s82, 1
    %s84 = scalar_select %p81, %s82, %s83
    %p87 = pneg %p81
    %p88 = scmp.eq.s32.totalorder %s11, 1
    %p89 = por %p87, %p88
    %p90 = scmp.ne.s32.totalorder %s82, %s85
    %p91 = scmp.eq.s32.totalorder %s11, 0
    %p92 = por %p90, %p91
    %p93 = scmp.ne.s32.totalorder %s82, %s85
    %p94 = scmp.eq.s32.totalorder %s16, 1
    %p95 = por %p93, %p94
    %p96 = scmp.ne.s32.totalorder %s85, %s86
    %p97 = scmp.eq.s32.totalorder %s16, 0
    %p98 = por %p96, %p97
    %p99 = scmp.ne.s32.totalorder %s85, %s86
    %p100 = scmp.eq.s32.totalorder %s17, 1
    %p101 = por %p99, %p100
    %p103 = scmp.ne.s32.totalorder %s86, %s102
    %p104 = scmp.eq.s32.totalorder %s17, 0
    %p105 = por %p103, %p104
    %s107 = sadd.s32 %s106, 1
    %p110 = scmp.eq.s32.totalorder %s11, 1
    %p111 = scmp.ne.s32.totalorder %s106, %s108
    %p112 = scmp.eq.s32.totalorder %s11, 0
    %p113 = por %p111, %p112
    %p114 = scmp.ne.s32.totalorder %s106, %s108
    %p115 = scmp.eq.s32.totalorder %s16, 1
    %p116 = por %p114, %p115
    %p117 = scmp.ne.s32.totalorder %s108, %s109
    %p118 = scmp.eq.s32.totalorder %s16, 0
    %p119 = por %p117, %p118
    %p120 = scmp.ne.s32.totalorder %s108, %s109
    %p121 = scmp.eq.s32.totalorder %s17, 1
    %p122 = por %p120, %p121
    %p124 = scmp.ne.s32.totalorder %s109, %s123
    %p125 = scmp.eq.s32.totalorder %s17, 0
    %p126 = por %p124, %p125
    %s128 = sadd.s32 %s127, 1
    %p131 = scmp.eq.s32.totalorder %s11, 1
    %p132 = scmp.ne.s32.totalorder %s127, %s129
    %p133 = scmp.eq.s32.totalorder %s11, 0
    %p134 = por %p132, %p133
    %p135 = scmp.ne.s32.totalorder %s127, %s129
    %p136 = scmp.eq.s32.totalorder %s16, 1
    %p137 = por %p135, %p136
    %p138 = scmp.ne.s32.totalorder %s129, %s130
    %p139 = scmp.eq.s32.totalorder %s16, 0
    %p140 = por %p138, %p139
    %p141 = scmp.ne.s32.totalorder %s129, %s130
    %p142 = scmp.eq.s32.totalorder %s17, 1
    %p143 = por %p141, %p142
    %p145 = scmp.ne.s32.totalorder %s130, %s144
    %p146 = scmp.eq.s32.totalorder %s17, 0
    %p147 = por %p145, %p146
    %s148 = ssub.s32 %s19, %s26
    %s149 = ssub.s32 %s18, %s30
    %s150 = sor.u32 %s148, %s149
    %p151 = scmp.eq.s32.totalorder %s150, 0
    %s153 = sadd.s32 %s152, 1
    %s154 = scalar_select %p151, %s152, %s153
    %p157 = pneg %p151
    %p158 = scmp.eq.s32.totalorder %s11, 1
    %p159 = por %p157, %p158
    %p160 = scmp.ne.s32.totalorder %s152, %s155
    %p161 = scmp.eq.s32.totalorder %s11, 0
    %p162 = por %p160, %p161
    %p163 = scmp.ne.s32.totalorder %s152, %s155
    %p164 = scmp.eq.s32.totalorder %s16, 1
    %p165 = por %p163, %p164
    %p166 = scmp.ne.s32.totalorder %s155, %s156
    %p167 = scmp.eq.s32.totalorder %s16, 0
    %p168 = por %p166, %p167
    %p169 = scmp.ne.s32.totalorder %s155, %s156
    %p170 = scmp.eq.s32.totalorder %s17, 1
    %p171 = por %p169, %p170
    %p173 = scmp.ne.s32.totalorder %s156, %s172
    %p174 = scmp.eq.s32.totalorder %s17, 0
    %p175 = por %p173, %p174
    %p176 = scmp.le.s32.totalorder 1, %s11
    %p177 = scmp.lt.s32.totalorder %s11, 3
    %p178 = pnand %p176, %p177
    %p179 = pneg %p178
    // Predicated region
    $region9: #{a_call__.1} parent=5 // pred_check
      _
    $region10: #{a_call__.1} parent=5 // pred_check_branch
      %181 = sbr.rel (%p178) target = $region12
    $region11: #{a_call__.1} parent=5 // pred_region
      %s182 = ssub.s32 %s11, 1
      // Predicated region
      $region13: #{a_call__.1} parent=11 // pred_check
        %p183 = pneg %p72
      $region14: #{a_call__.1} parent=11 // pred_check_branch
        %185 = sbr.rel (%p183) target = $region16
      $region15: #{a_call__.1} parent=11 // pred_region
        _
      $region16: #{a_call__.1} parent=11 // pred_fallthru
        _
      // Predicated region
      $region17: #{a_call__.1} parent=11 // pred_check
        %p186 = pneg %p98
      $region18: #{a_call__.1} parent=11 // pred_check_branch
        %188 = sbr.rel (%p186) target = $region20
      $region19: #{a_call__.1} parent=11 // pred_region
        %s189 = smul.u32 4, %s20
        %p190 = scmp.lt.s32.totalorder %s189, 3
        %s191 = scalar_select %p190, %s189, 3
        %s192 = smul.addr %s191, 4
        %s193 = scalar_lea.vmem %s2, %s192
        %s194 = smul.u32 4, %s20
      $region20: #{a_call__.1} parent=11 // pred_fallthru
        _
      // Predicated region
      $region21: #{a_call__.1} parent=11 // pred_check
        %p195 = pneg %p119
      $region22: #{a_call__.1} parent=11 // pred_check_branch
        %197 = sbr.rel (%p195) target = $region24
      $region23: #{a_call__.1} parent=11 // pred_region
        _
      $region24: #{a_call__.1} parent=11 // pred_fallthru
        _
      // Predicated region
      $region25: #{a_call__.1} parent=11 // pred_check
        %p198 = pneg %p140
      $region26: #{a_call__.1} parent=11 // pred_check_branch
        %200 = sbr.rel (%p198) target = $region28
      $region27: #{a_call__.1} parent=11 // pred_region
        _
      $region28: #{a_call__.1} parent=11 // pred_fallthru
        _
    $region12: #{a_call__.1} parent=5 // pred_fallthru
      _
    %p201 = scmp.lt.s32.totalorder %s11, 2
    // Predicated region
    $region29: #{a_call__.1} parent=5 // pred_check
      %p202 = pneg %p201
    $region30: #{a_call__.1} parent=5 // pred_check_branch
      %204 = sbr.rel (%p202) target = $region32
    $region31: #{a_call__.1} parent=5 // pred_region
      // Predicated region
      $region33: #{a_call__.1} parent=31 // pred_check
        %p205 = pneg %p45
      $region34: #{a_call__.1} parent=31 // pred_check_branch
        %207 = sbr.rel (%p205) target = $region36
      $region35: #{a_call__.1} parent=31 // pred_region
        %s208 = smul.u32 4, %s18
        %p209 = scmp.lt.s32.totalorder %s19, 1
        %s210 = scalar_select %p209, %s19, 1
        %p211 = scmp.lt.s32.totalorder %s208, 3
        %s212 = scalar_select %p211, %s208, 3
        %s213 = smul.addr %s210, 4
        %s214 = sadd.s32 %s212, %s213
        %s215 = smul.addr %s214, 4
        %s216 = scalar_lea.vmem %s0, %s215
        %s217 = smul.u32 4, %s18
      $region36: #{a_call__.1} parent=31 // pred_fallthru
        _
    $region32: #{a_call__.1} parent=5 // pred_fallthru
      _
    %p218 = scmp.le.s32.totalorder 1, %s11
    %p219 = scmp.lt.s32.totalorder %s11, 3
    %p220 = pnand %p218, %p219
    %p221 = pneg %p220
    // Predicated region
    $region37: #{a_call__.1} parent=5 // pred_check
      _
    $region38: #{a_call__.1} parent=5 // pred_check_branch
      %223 = sbr.rel (%p220) target = $region40
    $region39: #{a_call__.1} parent=5 // pred_region
      %s224 = ssub.s32 %s11, 1
      %s225 = smul.u32 4, %s20
      %p226 = scmp.lt.s32.totalorder %s21, 1
      %s227 = scalar_select %p226, %s21, 1
      %p228 = scmp.lt.s32.totalorder %s225, 3
      %s229 = scalar_select %p228, %s225, 3
      %s230 = smul.addr %s227, 4
      %s231 = sadd.s32 %s229, %s230
      %s232 = smul.addr %s231, 4
      %s233 = scalar_lea.vmem %s0, %s232
      %p234 = pneg %p51
      %p235 = pneg %p48
      %p236 = pneg %p72
      %p237 = pneg %p69
      %s238 = smul.u32 4, %s20
      %p239 = scmp.lt.s32.totalorder %s238, 3
      %s240 = scalar_select %p239, %s238, 3
      %s241 = smul.addr %s240, 4
      %s242 = scalar_lea.vmem %s2, %s241
      %p243 = pneg %p98
      %p244 = pneg %p95
      %p245 = pneg %p119
      %p246 = pneg %p116
      %p247 = pneg %p140
      %p248 = pneg %p137
      %p249 = pneg %p168
      %p250 = pneg %p165
      %s251 = smul.u32 4, %s20
      %p252 = scmp.lt.s32.totalorder %s21, 1
      %s253 = scalar_select %p252, %s21, 1
      %p254 = scmp.lt.s32.totalorder %s251, 3
      %s255 = scalar_select %p254, %s251, 3
      %s256 = smul.addr %s253, 4
      %s257 = sadd.s32 %s255, %s256
      %s258 = smul.addr %s257, 8
      %s259 = scalar_lea.vmem %s5, %s258
      %s260 = smul.u32 4, %s20
      %p261 = scmp.lt.s32.totalorder %s21, 1
      %s262 = scalar_select %p261, %s21, 1
      %p263 = scmp.lt.s32.totalorder %s260, 3
      %s264 = scalar_select %p263, %s260, 3
      %s265 = smul.addr %s262, 4
      %s266 = sadd.s32 %s264, %s265
      %s267 = smul.addr %s266, 4
      %s268 = scalar_lea.vmem %s0, %s267
      %s269 = smul.u32 4, %s20
      %s270 = smul.u32 4, %s20
      %p271 = scmp.lt.s32.totalorder %s270, 3
      %s272 = scalar_select %p271, %s270, 3
      %s273 = smul.addr %s272, 4
      %s274 = scalar_lea.vmem %s2, %s273
      %s275 = smul.u32 4, %s20
      %s276 = smul.u32 4, %s20
      %p277 = scmp.lt.s32.totalorder %s21, 1
      %s278 = scalar_select %p277, %s21, 1
      %p279 = scmp.lt.s32.totalorder %s276, 3
      %s280 = scalar_select %p279, %s276, 3
      %s281 = smul.addr %s278, 4
      %s282 = sadd.s32 %s280, %s281
      %s283 = smul.addr %s282, 8
      %s284 = scalar_lea.vmem %s5, %s283
      %s285 = smul.u32 4, %s20
      %v287 = vld [vmem:[%s268] sm:$0xf]
      %v288 = vld [vmem:[%s268 + $0x4] sm:$0xf]
      %v289 = vld [vmem:[%s268 + $0x8] sm:$0xf]
      %v290 = vld [vmem:[%s268 + $0xc] sm:$0xf]
      %v291 = vld [vmem:[%s1] sm:$0xf]
      %v292 = vld [vmem:[%s1 + $0x4] sm:$0xf]
      %v293 = vld [vmem:[%s1 + $0x8] sm:$0xf]
      %v294 = vld [vmem:[%s1 + $0xc] sm:$0xf]
      %v295 = vld [vmem:[%s1 + $0x10] sm:$0xf]
      %v296 = vld [vmem:[%s1 + $0x14] sm:$0xf]
      %v297 = vld [vmem:[%s274] sm:$0xf]
      %v298 = vld [vmem:[%s274 + $0x4] sm:$0xf]
      %v299 = vld [vmem:[%s274 + $0x8] sm:$0xf]
      %v300 = vld [vmem:[%s274 + $0xc] sm:$0xf]
      %v301 = vunpack.c.l.bf16 %v297
      %v302 = vunpack.c.l.bf16 %v298
      %v303 = vunpack.c.l.bf16 %v299
      %v304 = vunpack.c.l.bf16 %v300
      %v309 = vunpack.c.l.b16 %v287
      %v310 = vunpack.c.l.b16 %v288
      %v311 = vunpack.c.l.b16 %v289
      %v312 = vunpack.c.l.b16 %v290
      %v313 = vpack.c.b16 %v310, %v309
      %v314 = vpack.c.b16 %v312, %v311
      %v321 = vunpack.c.l.b16 %v291
      %v322 = vunpack.c.l.b16 %v292
      %v323 = vunpack.c.l.b16 %v293
      %v324 = vunpack.c.l.b16 %v294
      %v325 = vunpack.c.l.b16 %v295
      %v326 = vunpack.c.l.b16 %v296
      %v327 = vpack.c.b16 %v322, %v321
      %v328 = vpack.c.b16 %v324, %v323
      %v329 = vpack.c.b16 %v326, %v325
      %vm333 = vcmask 392192
      %v335 = vsel %vm333, %v313, 0
      %v338 = vsel %vm333, %v314, 0
      %340 = vmatpush.bf16.msra.mxu0 0
      %341 = vmatpush.bf16.msra.mxu0 0
      %342 = vmatpush.bf16.msra.mxu0 0
      %343 = vmatpush.bf16.msra.mxu0 0
      %344 = vmatpush.bf16.msra.mxu0 0
      %345 = vmatpush.bf16.msra.mxu0 %v329
      %346 = vmatpush.bf16.msra.mxu0 %v328
      %347 = vmatpush.bf16.msra.mxu0 %v327
      %348 = vmatmul.bf16.gmra.mxu0 %v335
      %v349 = vpop.f32.mrf.mxu0
      %v350 = vadd.f32 %v301, %v349
      %v351 = vpop.f32.mrf.mxu0
      %v352 = vadd.f32 %v302, %v351
      %353 = vmatmul.bf16.gmra.mxu0 %v338
      %v354 = vpop.f32.mrf.mxu0
      %v355 = vadd.f32 %v303, %v354
      %v356 = vpop.f32.mrf.mxu0
      %v357 = vadd.f32 %v304, %v356
      %358 = vdwg.mxu0
      %359 = vadd.xlane.f32.xlu0 %v350
      %v360 = vpop.xlane.xlu0 %359
      %361 = vadd.xlane.f32.xlu0 %v352
      %v362 = vpop.xlane.xlu0 %361
      %363 = vadd.xlane.f32.xlu0 %v355
      %v364 = vpop.xlane.xlu0 %363
      %365 = vadd.xlane.f32.xlu0 %v357
      %v366 = vpop.xlane.xlu0 %365
      %v367 = vmul.f32 %v360, 0.03125
      %v368 = vmul.f32 %v362, 0.03125
      %v369 = vmul.f32 %v364, 0.03125
      %v370 = vmul.f32 %v366, 0.03125
      %v371 = vsub.f32 %v350, %v367
      %v372 = vsub.f32 %v352, %v368
      %v373 = vsub.f32 %v355, %v369
      %v374 = vsub.f32 %v357, %v370
      %v375 = vmul.f32 %v371, %v371
      %v376 = vmul.f32 %v372, %v372
      %v377 = vmul.f32 %v373, %v373
      %v378 = vmul.f32 %v374, %v374
      %379 = vadd.xlane.f32.xlu0 %v375
      %v380 = vpop.xlane.xlu0 %379
      %381 = vadd.xlane.f32.xlu0 %v376
      %v382 = vpop.xlane.xlu0 %381
      %383 = vadd.xlane.f32.xlu0 %v377
      %v384 = vpop.xlane.xlu0 %383
      %385 = vadd.xlane.f32.xlu0 %v378
      %v386 = vpop.xlane.xlu0 %385
      %v387 = vmul.f32 %v367, 96.0
      %v388 = vmul.f32 %v368, 96.0
      %v389 = vmul.f32 %v369, 96.0
      %v390 = vmul.f32 %v370, 96.0
      %v391 = vmul.f32 %v387, %v367
      %v392 = vmul.f32 %v388, %v368
      %v393 = vmul.f32 %v389, %v369
      %v394 = vmul.f32 %v390, %v370
      %v395 = vsub.f32 %v380, %v391
      %v396 = vsub.f32 %v382, %v392
      %v397 = vsub.f32 %v384, %v393
      %v398 = vsub.f32 %v386, %v394
      %v399 = vmul.f32 %v395, 0.03125
      %v400 = vmul.f32 %v396, 0.03125
      %v401 = vmul.f32 %v397, 0.03125
      %v402 = vmul.f32 %v398, 0.03125
      %v403 = vmax.f32 %v399, 0.0
      %v404 = vmax.f32 %v400, 0.0
      %v405 = vmax.f32 %v401, 0.0
      %v406 = vmax.f32 %v402, 0.0
      %v407 = vadd.f32 %v403, 1e-05
      %v408 = vadd.f32 %v404, 1e-05
      %v409 = vadd.f32 %v405, 1e-05
      %v410 = vadd.f32 %v406, 1e-05
      %v411 = vrsqrt.pop %v407
      %v412 = vmul.f32 %v411, %v407
      %v413 = vmul.f32 %v412, %v411
      %v414 = vmul.f32 0.5, %v413
      %v415 = vsub.f32 1.5, %v414
      %v416 = vmul.f32 %v411, %v415
      %vm417 = vweird.f32 %v407
      %vm418 = vweird.f32 %v411
      %vm419 = vmor %vm417, %vm418
      %v420 = vsel %vm419, %v411, %v416
      %v421 = vrsqrt.pop %v408
      %v422 = vmul.f32 %v421, %v408
      %v423 = vmul.f32 %v422, %v421
      %v424 = vmul.f32 0.5, %v423
      %v425 = vsub.f32 1.5, %v424
      %v426 = vmul.f32 %v421, %v425
      %vm427 = vweird.f32 %v408
      %vm428 = vweird.f32 %v421
      %vm429 = vmor %vm427, %vm428
      %v430 = vsel %vm429, %v421, %v426
      %v431 = vrsqrt.pop %v409
      %v432 = vmul.f32 %v431, %v409
      %v433 = vmul.f32 %v432, %v431
      %v434 = vmul.f32 0.5, %v433
      %v435 = vsub.f32 1.5, %v434
      %v436 = vmul.f32 %v431, %v435
      %vm437 = vweird.f32 %v409
      %vm438 = vweird.f32 %v431
      %vm439 = vmor %vm437, %vm438
      %v440 = vsel %vm439, %v431, %v436
      %v441 = vrsqrt.pop %v410
      %v442 = vmul.f32 %v441, %v410
      %v443 = vmul.f32 %v442, %v441
      %v444 = vmul.f32 0.5, %v443
      %v445 = vsub.f32 1.5, %v444
      %v446 = vmul.f32 %v441, %v445
      %vm447 = vweird.f32 %v410
      %vm448 = vweird.f32 %v441
      %vm449 = vmor %vm447, %vm448
      %v450 = vsel %vm449, %v441, %v446
      %v451 = vmul.f32 %v371, %v420
      %v452 = vmul.f32 %v372, %v430
      %v453 = vmul.f32 %v373, %v440
      %v454 = vmul.f32 %v374, %v450
      %v455 = vld [vmem:[%s3] sm:$0x1]
      %v457 = vperm.slane %v455, 0
      %v459 = vmul.f32 %v451, %v457
      %v460 = vmul.f32 %v452, %v457
      %v461 = vmul.f32 %v453, %v457
      %v462 = vmul.f32 %v454, %v457
      %v463 = vld [vmem:[%s4] sm:$0x1]
      %v465 = vperm.slane %v463, 0
      %v467 = vadd.f32 %v459, %v465
      %v468 = vadd.f32 %v460, %v465
      %v469 = vadd.f32 %v461, %v465
      %v470 = vadd.f32 %v462, %v465
      %471 = vst [vmem:[%s284] sm:$0xff] %v467
      %472 = vst [vmem:[%s284 + $0x8] sm:$0xff] %v468
      %473 = vst [vmem:[%s284 + $0x10] sm:$0xff] %v469
      %474 = vst [vmem:[%s284 + $0x18] sm:$0xff] %v470
      %s475 = smul.u32 4, %s20
      %p476 = scmp.lt.s32.totalorder %s21, 1
      %s477 = scalar_select %p476, %s21, 1
      %p478 = scmp.lt.s32.totalorder %s475, 3
      %s479 = scalar_select %p478, %s475, 3
      %s480 = smul.addr %s477, 4
      %s481 = sadd.s32 %s479, %s480
      %s482 = smul.addr %s481, 8
      %s483 = scalar_lea.vmem %s5, %s482
      // Predicated region
      $region41: #{a_call__.1} parent=39 // pred_check
        %p484 = pneg %p165
      $region42: #{a_call__.1} parent=39 // pred_check_branch
        %486 = sbr.rel (%p484) target = $region44
      $region43: #{a_call__.1} parent=39 // pred_region
        %s487 = smul.u32 4, %s20
      $region44: #{a_call__.1} parent=39 // pred_fallthru
        _
    $region40: #{a_call__.1} parent=5 // pred_fallthru
      _
    %p488 = scmp.le.s32.totalorder 2, %s11
    // Predicated region
    $region45: #{a_call__.1} parent=5 // pred_check
      %p489 = pneg %p488
    $region46: #{a_call__.1} parent=5 // pred_check_branch
      %491 = sbr.rel (%p489) target = $region48
    $region47: #{a_call__.1} parent=5 // pred_region
      %s492 = ssub.s32 %s11, 2
      // Predicated region
      $region49: #{a_call__.1} parent=47 // pred_check
        %p493 = pneg %p171
      $region50: #{a_call__.1} parent=47 // pred_check_branch
        %495 = sbr.rel (%p493) target = $region52
      $region51: #{a_call__.1} parent=47 // pred_region
        %s496 = smul.u32 4, %s22
        %p497 = scmp.lt.s32.totalorder %s23, 1
        %s498 = scalar_select %p497, %s23, 1
        %p499 = scmp.lt.s32.totalorder %s496, 3
        %s500 = scalar_select %p499, %s496, 3
        %s501 = smul.addr %s498, 4
        %s502 = sadd.s32 %s500, %s501
        %s503 = smul.addr %s502, 8
        %s504 = scalar_lea.vmem %s5, %s503
      $region52: #{a_call__.1} parent=47 // pred_fallthru
        _
    $region48: #{a_call__.1} parent=5 // pred_fallthru
      _
  $region6: #{a_call__.1} parent=0 // loop_footer
    %s15 = sadd.s32 1, %s11
  $region7: #{a_call__.1} parent=0 // loop_footer_branch
    %10 = sbr.rel target = $region3
  $region8: #{a_call__.1} parent=0 // loop_exit
    _

</llo_original>
